<compile_context>
chip_gen: v6e
topology: v6e:2x2x1
jax: 0.10.0
libtpu: 0.0.40
codegen_flags: <defaults>
</compile_context>

<pallas_src>
import jax
import jax.numpy as jnp
from jax.experimental import pallas as pl
from jax.experimental.pallas import tpu as pltpu


def keypoint_encoder_kernel(x_ref, w1_ref, b1_ref, w2_ref, b2_ref, o_ref):
    # conv1 (center tap only -> plain MXU matmul), f32 accumulation.
    h = jnp.dot(x_ref[...], w1_ref[...], preferred_element_type=jnp.float32)
    h = jnp.maximum(h + b1_ref[...], 0.0)           # bias + relu in f32 (VPU)
    # conv2 (center tap only); feed the MXU its operand dtype (bf16 fast path).
    h = h.astype(w2_ref.dtype)
    y = jnp.dot(h, w2_ref[...], preferred_element_type=jnp.float32)
    y = jnp.maximum(y + b2_ref[...], 0.0)
    # AdaptiveAvgPool1d(1) over a length-1 sequence == identity; squeeze(-1)
    # is already reflected in the 2-D output layout.
    o_ref[...] = y.astype(o_ref.dtype)


def keypoint_encoder(x, w1, b1, w2, b2, *, tile_b=1024,
                     compute_dtype=jnp.bfloat16):
    """relu(relu(x @ w1 + b1) @ w2 + b2) with batch tiling on TPU.

    x  : (B, in_dim) f32
    w1 : (in_dim, hidden)  = conv1.weight[:, :, 1].T
    b1 : (hidden,)
    w2 : (hidden, embed)   = conv2.weight[:, :, 1].T
    b2 : (embed,)
    """
    B, in_dim = x.shape
    hidden = w1.shape[1]
    embed = w2.shape[1]

    # ---- host-side layout prep ---------------------------------------------
    # Pad the contraction dim to a multiple of 8 (sublane alignment for w1's
    # leading dim).  Zero rows contribute nothing to the matmul.
    in_pad = (-in_dim) % 8
    if in_pad:
        x = jnp.pad(x, ((0, 0), (0, in_pad)))
        w1 = jnp.pad(w1, ((0, in_pad), (0, 0)))
    in_dim_p = in_dim + in_pad

    # MXU-native operands (bf16 in / f32 accumulate) and halved HBM traffic
    # for x and the weights; biases stay f32 for the epilogue.
    x = x.astype(compute_dtype)
    w1 = w1.astype(compute_dtype)
    w2 = w2.astype(compute_dtype)
    b1 = jnp.asarray(b1, jnp.float32).reshape(1, hidden)
    b2 = jnp.asarray(b2, jnp.float32).reshape(1, embed)

    # ---- batch tiling --------------------------------------------------------
    # Largest tile that fits comfortably in VMEM, but keep >= 2 grid steps when
    # the batch allows, so both v7x TensorCores get work.
    n_steps = max(2, pl.cdiv(B, tile_b))
    tb = max(8, ((pl.cdiv(B, n_steps) + 7) // 8) * 8)
    n_steps = pl.cdiv(B, tb)
    b_pad = n_steps * tb - B
    if b_pad:
        x = jnp.pad(x, ((0, b_pad), (0, 0)))

    # VMEM estimate: double-buffered batch tiles + resident weights/biases.
    # Only raise the scoped limit when the default would be tight; stay well
    # inside v7x's 64 MiB physical VMEM.
    itemsize = jnp.dtype(compute_dtype).itemsize
    vmem_est = (2 * tb * in_dim_p * itemsize                        # x tiles
                + 2 * tb * embed * 4                                # out tiles
                + 2 * (in_dim_p * hidden + hidden * embed) * itemsize
                + 2 * (hidden + embed) * 4)                         # biases
    cparams = dict(dimension_semantics=("parallel",))
    if vmem_est > 12 * 1024 * 1024:
        cparams["vmem_limit_bytes"] = int(min(2 * vmem_est, 56 * 1024 * 1024))

    out = pl.pallas_call(
        keypoint_encoder_kernel,
        out_shape=jax.ShapeDtypeStruct((B + b_pad, embed), jnp.float32),
        grid_spec=pltpu.PrefetchScalarGridSpec(
            num_scalar_prefetch=0,
            grid=(n_steps,),
            in_specs=[
                pl.BlockSpec((tb, in_dim_p), lambda i: (i, 0)),
                pl.BlockSpec((in_dim_p, hidden), lambda i: (0, 0)),
                pl.BlockSpec((1, hidden), lambda i: (0, 0)),
                pl.BlockSpec((hidden, embed), lambda i: (0, 0)),
                pl.BlockSpec((1, embed), lambda i: (0, 0)),
            ],
            out_specs=pl.BlockSpec((tb, embed), lambda i: (i, 0)),
        ),
        compiler_params=pltpu.CompilerParams(**cparams),
    )(x, w1, b1, w2, b2)
    return out[:B]


def reference(x, w1, b1, w2, b2):
    h = jnp.maximum(x @ w1 + b1, 0.0)
    return jnp.maximum(h @ w2 + b2, 0.0)


if __name__ == "__main__":
    # 17 COCO keypoints * 2 coords = 34 input features; module defaults
    # (conv1 -> 128 channels, embed = 512).
    B, in_dim, hidden, embed = 16, 34, 128, 512

    key = jax.random.PRNGKey(0)
    kx, k1w, k1b, k2w, k2b = jax.random.split(key, 5)

    x = jax.random.normal(kx, (B, in_dim), dtype=jnp.float32)

    # Synthetic Conv1d parameters (full (out, in, 3) kernels, PyTorch-style
    # uniform fan-in scaling).
    s1 = 1.0 / jnp.sqrt(in_dim * 3.0)
    conv1_w = jax.random.uniform(k1w, (hidden, in_dim, 3), jnp.float32, -s1, s1)
    conv1_b = jax.random.uniform(k1b, (hidden,), jnp.float32, -s1, s1)
    s2 = 1.0 / jnp.sqrt(hidden * 3.0)
    conv2_w = jax.random.uniform(k2w, (embed, hidden, 3), jnp.float32, -s2, s2)
    conv2_b = jax.random.uniform(k2b, (embed,), jnp.float32, -s2, s2)

    # Only the center tap of each 3-wide kernel ever touches real data
    # (length-1 sequence with zero padding) => conv reduces exactly to matmul.
    w1 = conv1_w[:, :, 1].T            # (in_dim, 128)
    w2 = conv2_w[:, :, 1].T            # (128, embed)

    ref = reference(x, w1, conv1_b.reshape(1, -1), w2, conv2_b.reshape(1, -1))

    # Exact (f32-operand) path.
    out_f32 = jax.block_until_ready(
        keypoint_encoder(x, w1, conv1_b, w2, conv2_b,
                         compute_dtype=jnp.float32))
    assert out_f32.shape == (B, embed)
    assert jnp.allclose(out_f32, ref, atol=1e-4, rtol=1e-4), "f32 mismatch"

    # Fast (bf16-operand, f32-accumulate) path -- the production default.
    out_bf16 = jax.block_until_ready(
        keypoint_encoder(x, w1, conv1_b, w2, conv2_b,
                         compute_dtype=jnp.bfloat16))
    assert out_bf16.shape == (B, embed)
    assert jnp.allclose(out_bf16, ref, atol=5e-2, rtol=5e-2), "bf16 mismatch"

    print("KERNEL_OK")
</pallas_src>

<mosaic_0001>
module attributes {stable_mosaic.version = 11 : i64} {
  func.func @keypoint_encoder_kernel(%arg0: i32, %arg1: memref<8x40xf32, #tpu.memory_space<vmem>>, %arg2: memref<40x128xf32, #tpu.memory_space<vmem>>, %arg3: memref<1x128xf32, #tpu.memory_space<vmem>>, %arg4: memref<128x512xf32, #tpu.memory_space<vmem>>, %arg5: memref<1x512xf32, #tpu.memory_space<vmem>>, %arg6: memref<8x512xf32, #tpu.memory_space<vmem>>) attributes {dimension_semantics = [#tpu.dimension_semantics<parallel>], iteration_bounds = array<i64: 2>, scalar_prefetch = 0 : i64, scratch_operands = 0 : i64, tpu.core_type = #tpu.core_type<tc>, window_params = [{transform_indices = @transform_0, window_bounds = array<i64: 8, 40>}, {pipeline_mode = #tpu.pipeline_mode<synchronous>, transform_indices = @transform_1, window_bounds = array<i64: 40, 128>}, {pipeline_mode = #tpu.pipeline_mode<synchronous>, transform_indices = @transform_2, window_bounds = array<i64: 1, 128>}, {pipeline_mode = #tpu.pipeline_mode<synchronous>, transform_indices = @transform_3, window_bounds = array<i64: 128, 512>}, {pipeline_mode = #tpu.pipeline_mode<synchronous>, transform_indices = @transform_4, window_bounds = array<i64: 1, 512>}, {transform_indices = @transform_5, window_bounds = array<i64: 8, 512>}]} {
    %c0 = arith.constant 0 : index
    %c0_0 = arith.constant 0 : index
    %0 = vector.load %arg1[%c0, %c0_0] : memref<8x40xf32, #tpu.memory_space<vmem>>, vector<8x40xf32>
    %c0_1 = arith.constant 0 : index
    %c0_2 = arith.constant 0 : index
    %1 = vector.load %arg2[%c0_1, %c0_2] : memref<40x128xf32, #tpu.memory_space<vmem>>, vector<40x128xf32>
    %cst = arith.constant dense<0.000000e+00> : vector<8x128xf32>
    %2 = tpu.matmul %0, %1, %cst {dimension_numbers = #tpu.dot_dimension_numbers<[1], [0], [0], [1], [0, 0, 1, 1], [], []>} : vector<8x40xf32>, vector<40x128xf32>, vector<8x128xf32> -> vector<8x128xf32>
    %c0_3 = arith.constant 0 : index
    %c0_4 = arith.constant 0 : index
    %3 = vector.load %arg3[%c0_3, %c0_4] : memref<1x128xf32, #tpu.memory_space<vmem>>, vector<1x128xf32>
    %4 = vector.broadcast %3 : vector<1x128xf32> to vector<8x128xf32>
    %5 = arith.addf %2, %4 : vector<8x128xf32>
    %cst_5 = arith.constant 0.000000e+00 : f32
    %6 = vector.broadcast %cst_5 : f32 to vector<8x128xf32>
    %7 = arith.maximumf %5, %6 : vector<8x128xf32>
    %c0_6 = arith.constant 0 : index
    %c0_7 = arith.constant 0 : index
    %8 = vector.load %arg4[%c0_6, %c0_7] : memref<128x512xf32, #tpu.memory_space<vmem>>, vector<128x512xf32>
    %cst_8 = arith.constant dense<0.000000e+00> : vector<8x512xf32>
    %9 = tpu.matmul %7, %8, %cst_8 {dimension_numbers = #tpu.dot_dimension_numbers<[1], [0], [0], [1], [0, 0, 1, 1], [], []>} : vector<8x128xf32>, vector<128x512xf32>, vector<8x512xf32> -> vector<8x512xf32>
    %c0_9 = arith.constant 0 : index
    %c0_10 = arith.constant 0 : index
    %10 = vector.load %arg5[%c0_9, %c0_10] : memref<1x512xf32, #tpu.memory_space<vmem>>, vector<1x512xf32>
    %11 = vector.broadcast %10 : vector<1x512xf32> to vector<8x512xf32>
    %12 = arith.addf %9, %11 : vector<8x512xf32>
    %cst_11 = arith.constant 0.000000e+00 : f32
    %13 = vector.broadcast %cst_11 : f32 to vector<8x512xf32>
    %14 = arith.maximumf %12, %13 : vector<8x512xf32>
    %c0_12 = arith.constant 0 : index
    %c0_13 = arith.constant 0 : index
    %15 = vector.load %arg6[%c0_12, %c0_13] : memref<8x512xf32, #tpu.memory_space<vmem>>, vector<8x512xf32>
    tpu.vector_store %arg6[%c0_12, %c0_13], %14 {strides = array<i32>} : memref<8x512xf32, #tpu.memory_space<vmem>>, vector<8x512xf32>,
    return
  }
  func.func @transform_0(%arg0: i32) -> (i32, i32) {
    %c0_i32 = arith.constant 0 : i32
    %c0_i32_0 = arith.constant 0 : i32
    return %arg0, %c0_i32 : i32, i32
  }
  func.func @transform_1(%arg0: i32) -> (i32, i32) {
    %c0_i32 = arith.constant 0 : i32
    %c0_i32_0 = arith.constant 0 : i32
    %c0_i32_1 = arith.constant 0 : i32
    return %c0_i32, %c0_i32_0 : i32, i32
  }
  func.func @transform_2(%arg0: i32) -> (i32, i32) {
    %c0_i32 = arith.constant 0 : i32
    %c0_i32_0 = arith.constant 0 : i32
    %c0_i32_1 = arith.constant 0 : i32
    return %c0_i32, %c0_i32_0 : i32, i32
  }
  func.func @transform_3(%arg0: i32) -> (i32, i32) {
    %c0_i32 = arith.constant 0 : i32
    %c0_i32_0 = arith.constant 0 : i32
    %c0_i32_1 = arith.constant 0 : i32
    return %c0_i32, %c0_i32_0 : i32, i32
  }
  func.func @transform_4(%arg0: i32) -> (i32, i32) {
    %c0_i32 = arith.constant 0 : i32
    %c0_i32_0 = arith.constant 0 : i32
    %c0_i32_1 = arith.constant 0 : i32
    return %c0_i32, %c0_i32_0 : i32, i32
  }
  func.func @transform_5(%arg0: i32) -> (i32, i32) {
    %c0_i32 = arith.constant 0 : i32
    %c0_i32_0 = arith.constant 0 : i32
    return %arg0, %c0_i32 : i32, i32
  }
}

</mosaic_0001>

<llo_original>
// kernel: tpu_custom_call.1
$region0: #{tpu_custom_call.1}
  #allocation0 [shape = 'u32[]', space=smem, size = 0x4, offset = 0x4, fixed_abs, tag = 'smem constant byte address 0x4 - core index']
  #allocation1 [shape = 'u32[144,128]{1,0:T(1,128)}', space=vmem, size = 0x12000, scoped, tag = 'internal scratch']
  %s0 = inlined_call_operand.hbm [shape: f32[16,40], index: 0, kind: input, shape index: {}]
  %s1 = inlined_call_operand.hbm [shape: f32[40,128], index: 1, kind: input, shape index: {}]
  %s2 = inlined_call_operand.vmem [shape: f32[1,128], index: 2, kind: input, shape index: {}]
  %s3 = inlined_call_operand.hbm [shape: f32[128,512], index: 3, kind: input, shape index: {}]
  %s4 = inlined_call_operand.vmem [shape: f32[1,512], index: 4, kind: input, shape index: {}]
  %s5 = inlined_call_operand.hbm [shape: f32[16,512], index: 5, kind: output, shape index: {}]
  %s6 = sld [smem:[#allocation0]]
  $region65: #{tpu_custom_call.1} parent=0
    _
  %s8 = ssub.s32 1, %s6
  %s9 = scalar_select 0, %s8, %s6
  $region1: #{tpu_custom_call.1} parent=0
    #allocation2 [shape = 'u8[8192]{0}', space=vmem, size = 0x2000, scoped, tag = 'input window, operand 0']
    #allocation3 [shape = 's32[2]{0}', space=sflag, size = 0x8, scoped, tag = 'scoped memory for tpu_custom_call.1']
    #allocation4 [shape = 's32[2]{0}', space=sflag, size = 0x8, scoped, tag = 'scoped memory for tpu_custom_call.1']
    #allocation5 [shape = 'u8[20480]{0}', space=vmem, size = 0x5000, scoped, tag = 'input window, operand 1, single buffered']
    #allocation6 [shape = 's32[1]{0}', space=sflag, size = 0x4, scoped, tag = 'scoped memory for tpu_custom_call.1']
    #allocation7 [shape = 'u8[262144]{0}', space=vmem, size = 0x40000, scoped, tag = 'input window, operand 3, single buffered']
    #allocation8 [shape = 'u8[32768]{0}', space=vmem, size = 0x8000, scoped, tag = 'output window, operand 0']
    %10 = vsyncpa [#allocation3], 0
    %s11 = scalar_lea.sflag [#allocation3], 1
    %12 = vsyncpa %s11, 0
    %13 = vsyncpa [#allocation6], 0
    %14 = vsyncpa [#allocation4], 0
    %s15 = scalar_lea.sflag [#allocation4], 1
    %16 = vsyncpa %s15, 0
    loop: start=0, step=1, limit=4
    $region2: #{tpu_custom_call.1} parent=1 // loop_pre_header
      _
    $region3: #{tpu_custom_call.1} parent=1 // loop_header
      %s18 = sphi 0, %s22
      %p19 = scmp.ge.s32.totalorder %s18, 4
      %s28 = sphi 0, %s30
      %s31 = sphi 0, %s28
      %s32 = sphi 0, %s31
      %s48 = sphi 0, %s32
      %s52 = sphi 0, %s52
      %s54 = sphi 0, %s52
      %s55 = sphi 0, %s54
      %s69 = sphi 0, %s55
      %s73 = sphi 0, %s73
      %s75 = sphi 0, %s73
      %s76 = sphi 0, %s75
      %s90 = sphi 0, %s76
      %s94 = sphi 0, %s94
      %s96 = sphi 0, %s94
      %s97 = sphi 0, %s96
      %s111 = sphi 0, %s97
      %s115 = sphi 0, %s115
      %s117 = sphi 0, %s115
      %s118 = sphi 0, %s117
      %s132 = sphi 0, %s118
      %s138 = sphi 0, %s140
      %s141 = sphi 0, %s138
      %s142 = sphi 0, %s141
      %s158 = sphi 0, %s142
    $region4: #{tpu_custom_call.1} parent=1 // loop_header_branch
      %21 = sbr.rel (%p19) target = $region8
    $region5: #{tpu_custom_call.1} parent=1 // loop_body
      %s23 = ssub.s32 %s18, 1
      %s24 = ssub.s32 %s18, 2
      %s25 = sadd.s32 %s18, 1
      %s26 = ssub.s32 %s18, %s25
      %p27 = scmp.eq.s32.totalorder %s26, 0
      %s29 = sadd.s32 %s28, 1
      %s30 = scalar_select %p27, %s28, %s29
      %p33 = pneg %p27
      %p34 = scmp.eq.s32.totalorder %s18, 1
      %p35 = por %p33, %p34
      %p36 = scmp.ne.s32.totalorder %s28, %s31
      %p37 = scmp.eq.s32.totalorder %s18, 0
      %p38 = por %p36, %p37
      %p39 = scmp.ne.s32.totalorder %s28, %s31
      %p40 = scmp.eq.s32.totalorder %s23, 1
      %p41 = por %p39, %p40
      %p42 = scmp.ne.s32.totalorder %s31, %s32
      %p43 = scmp.eq.s32.totalorder %s23, 0
      %p44 = por %p42, %p43
      %p45 = scmp.ne.s32.totalorder %s31, %s32
      %p46 = scmp.eq.s32.totalorder %s24, 1
      %p47 = por %p45, %p46
      %p49 = scmp.ne.s32.totalorder %s32, %s48
      %p50 = scmp.eq.s32.totalorder %s24, 0
      %p51 = por %p49, %p50
      %s53 = sadd.s32 %s52, 1
      %p56 = scmp.eq.s32.totalorder %s18, 1
      %p57 = scmp.ne.s32.totalorder %s52, %s54
      %p58 = scmp.eq.s32.totalorder %s18, 0
      %p59 = por %p57, %p58
      %p60 = scmp.ne.s32.totalorder %s52, %s54
      %p61 = scmp.eq.s32.totalorder %s23, 1
      %p62 = por %p60, %p61
      %p63 = scmp.ne.s32.totalorder %s54, %s55
      %p64 = scmp.eq.s32.totalorder %s23, 0
      %p65 = por %p63, %p64
      %p66 = scmp.ne.s32.totalorder %s54, %s55
      %p67 = scmp.eq.s32.totalorder %s24, 1
      %p68 = por %p66, %p67
      %p70 = scmp.ne.s32.totalorder %s55, %s69
      %p71 = scmp.eq.s32.totalorder %s24, 0
      %p72 = por %p70, %p71
      %s74 = sadd.s32 %s73, 1
      %p77 = scmp.eq.s32.totalorder %s18, 1
      %p78 = scmp.ne.s32.totalorder %s73, %s75
      %p79 = scmp.eq.s32.totalorder %s18, 0
      %p80 = por %p78, %p79
      %p81 = scmp.ne.s32.totalorder %s73, %s75
      %p82 = scmp.eq.s32.totalorder %s23, 1
      %p83 = por %p81, %p82
      %p84 = scmp.ne.s32.totalorder %s75, %s76
      %p85 = scmp.eq.s32.totalorder %s23, 0
      %p86 = por %p84, %p85
      %p87 = scmp.ne.s32.totalorder %s75, %s76
      %p88 = scmp.eq.s32.totalorder %s24, 1
      %p89 = por %p87, %p88
      %p91 = scmp.ne.s32.totalorder %s76, %s90
      %p92 = scmp.eq.s32.totalorder %s24, 0
      %p93 = por %p91, %p92
      %s95 = sadd.s32 %s94, 1
      %p98 = scmp.eq.s32.totalorder %s18, 1
      %p99 = scmp.ne.s32.totalorder %s94, %s96
      %p100 = scmp.eq.s32.totalorder %s18, 0
      %p101 = por %p99, %p100
      %p102 = scmp.ne.s32.totalorder %s94, %s96
      %p103 = scmp.eq.s32.totalorder %s23, 1
      %p104 = por %p102, %p103
      %p105 = scmp.ne.s32.totalorder %s96, %s97
      %p106 = scmp.eq.s32.totalorder %s23, 0
      %p107 = por %p105, %p106
      %p108 = scmp.ne.s32.totalorder %s96, %s97
      %p109 = scmp.eq.s32.totalorder %s24, 1
      %p110 = por %p108, %p109
      %p112 = scmp.ne.s32.totalorder %s97, %s111
      %p113 = scmp.eq.s32.totalorder %s24, 0
      %p114 = por %p112, %p113
      %s116 = sadd.s32 %s115, 1
      %p119 = scmp.eq.s32.totalorder %s18, 1
      %p120 = scmp.ne.s32.totalorder %s115, %s117
      %p121 = scmp.eq.s32.totalorder %s18, 0
      %p122 = por %p120, %p121
      %p123 = scmp.ne.s32.totalorder %s115, %s117
      %p124 = scmp.eq.s32.totalorder %s23, 1
      %p125 = por %p123, %p124
      %p126 = scmp.ne.s32.totalorder %s117, %s118
      %p127 = scmp.eq.s32.totalorder %s23, 0
      %p128 = por %p126, %p127
      %p129 = scmp.ne.s32.totalorder %s117, %s118
      %p130 = scmp.eq.s32.totalorder %s24, 1
      %p131 = por %p129, %p130
      %p133 = scmp.ne.s32.totalorder %s118, %s132
      %p134 = scmp.eq.s32.totalorder %s24, 0
      %p135 = por %p133, %p134
      %s136 = ssub.s32 %s18, %s25
      %p137 = scmp.eq.s32.totalorder %s136, 0
      %s139 = sadd.s32 %s138, 1
      %s140 = scalar_select %p137, %s138, %s139
      %p143 = pneg %p137
      %p144 = scmp.eq.s32.totalorder %s18, 1
      %p145 = por %p143, %p144
      %p146 = scmp.ne.s32.totalorder %s138, %s141
      %p147 = scmp.eq.s32.totalorder %s18, 0
      %p148 = por %p146, %p147
      %p149 = scmp.ne.s32.totalorder %s138, %s141
      %p150 = scmp.eq.s32.totalorder %s23, 1
      %p151 = por %p149, %p150
      %p152 = scmp.ne.s32.totalorder %s141, %s142
      %p153 = scmp.eq.s32.totalorder %s23, 0
      %p154 = por %p152, %p153
      %p155 = scmp.ne.s32.totalorder %s141, %s142
      %p156 = scmp.eq.s32.totalorder %s24, 1
      %p157 = por %p155, %p156
      %p159 = scmp.ne.s32.totalorder %s142, %s158
      %p160 = scmp.eq.s32.totalorder %s24, 0
      %p161 = por %p159, %p160
      %p162 = scmp.le.s32.totalorder 1, %s18
      %p163 = scmp.lt.s32.totalorder %s18, 3
      %p164 = pnand %p162, %p163
      %p165 = pneg %p164
      // Predicated region
      $region9: #{tpu_custom_call.1} parent=5 // pred_check
        _
      $region10: #{tpu_custom_call.1} parent=5 // pred_check_branch
        %167 = sbr.rel (%p164) target = $region12
      $region11: #{tpu_custom_call.1} parent=5 // pred_region
        %s168 = ssub.s32 %s18, 1
        // Predicated region
        $region13: #{tpu_custom_call.1} parent=11 // pred_check
          %p169 = pneg %p65
        $region14: #{tpu_custom_call.1} parent=11 // pred_check_branch
          %171 = sbr.rel (%p169) target = $region16
        $region15: #{tpu_custom_call.1} parent=11 // pred_region
          %s173 = ssub.s32 640, 640
          %174 = vsyncadd [#allocation6], %s173
          %s175 = sshll.u32 [#allocation5], 4
          %s176 = int_to_ptr.vmem [resolvable:$true] %s175
          %181 = dma.hbm_to_vmem [thread:$0]  %s1, 640, %s176, [#allocation6], 128, 128, 8
        $region16: #{tpu_custom_call.1} parent=11 // pred_fallthru
          _
        // Predicated region
        $region17: #{tpu_custom_call.1} parent=11 // pred_check
          %p182 = pneg %p86
        $region18: #{tpu_custom_call.1} parent=11 // pred_check_branch
          %184 = sbr.rel (%p182) target = $region20
        $region19: #{tpu_custom_call.1} parent=11 // pred_region
          _
        $region20: #{tpu_custom_call.1} parent=11 // pred_fallthru
          _
        // Predicated region
        $region21: #{tpu_custom_call.1} parent=11 // pred_check
          %p185 = pneg %p107
        $region22: #{tpu_custom_call.1} parent=11 // pred_check_branch
          %187 = sbr.rel (%p185) target = $region24
        $region23: #{tpu_custom_call.1} parent=11 // pred_region
          %s189 = ssub.s32 8192, 8192
          %190 = vsyncadd [#allocation6], %s189
          %s191 = sshll.u32 [#allocation7], 4
          %s192 = int_to_ptr.vmem [resolvable:$true] %s191
          %197 = dma.hbm_to_vmem [thread:$0]  %s3, 8192, %s192, [#allocation6], 512, 512, 32
        $region24: #{tpu_custom_call.1} parent=11 // pred_fallthru
          _
        // Predicated region
        $region25: #{tpu_custom_call.1} parent=11 // pred_check
          %p198 = pneg %p128
        $region26: #{tpu_custom_call.1} parent=11 // pred_check_branch
          %200 = sbr.rel (%p198) target = $region28
        $region27: #{tpu_custom_call.1} parent=11 // pred_region
          _
        $region28: #{tpu_custom_call.1} parent=11 // pred_fallthru
          _
      $region12: #{tpu_custom_call.1} parent=5 // pred_fallthru
        _
      %p201 = scmp.lt.s32.totalorder %s18, 2
      // Predicated region
      $region29: #{tpu_custom_call.1} parent=5 // pred_check
        %p202 = pneg %p201
      $region30: #{tpu_custom_call.1} parent=5 // pred_check_branch
        %204 = sbr.rel (%p202) target = $region32
      $region31: #{tpu_custom_call.1} parent=5 // pred_region
        // Predicated region
        $region33: #{tpu_custom_call.1} parent=31 // pred_check
          %p205 = pneg %p38
        $region34: #{tpu_custom_call.1} parent=31 // pred_check_branch
          %207 = sbr.rel (%p205) target = $region36
        $region35: #{tpu_custom_call.1} parent=31 // pred_region
          %s208 = sand.u32 %s28, 1
          %s209 = scalar_lea.sflag [#allocation3], %s208
          %s210 = sand.u32 %s28, 1
          %s211 = smul.addr %s210, 8
          %s212 = scalar_lea.vmem [#allocation2], %s211
          %s214 = ssub.s32 128, 128
          %215 = vsyncadd %s209, %s214
          %s216 = smul.addr %s18, 128
          %s217 = scalar_lea.hbm %s0, %s216
          %s219 = sshll.u32 %s212, 4
          %s220 = int_to_ptr.vmem [resolvable:$true] %s219
          %222 = dma.hbm_to_vmem [thread:$0]  %s217, 128, %s220, %s209
        $region36: #{tpu_custom_call.1} parent=31 // pred_fallthru
          _
      $region32: #{tpu_custom_call.1} parent=5 // pred_fallthru
        _
      %p223 = scmp.le.s32.totalorder 1, %s18
      %p224 = scmp.lt.s32.totalorder %s18, 3
      %p225 = pnand %p223, %p224
      %p226 = pneg %p225
      // Predicated region
      $region37: #{tpu_custom_call.1} parent=5 // pred_check
        _
      $region38: #{tpu_custom_call.1} parent=5 // pred_check_branch
        %228 = sbr.rel (%p225) target = $region40
      $region39: #{tpu_custom_call.1} parent=5 // pred_region
        %s229 = ssub.s32 %s18, 1
        %s230 = sand.u32 %s31, 1
        %s231 = scalar_lea.sflag [#allocation3], %s230
        %s232 = sand.u32 %s31, 1
        %s233 = smul.addr %s232, 8
        %s234 = scalar_lea.vmem [#allocation2], %s233
        // Predicated region
        $region41: #{tpu_custom_call.1} parent=39 // pred_check
          %p235 = pneg %p44
        $region42: #{tpu_custom_call.1} parent=39 // pred_check_branch
          %237 = sbr.rel (%p235) target = $region44
        $region43: #{tpu_custom_call.1} parent=39 // pred_region
          %238 = dma.done %s231, 128
        $region44: #{tpu_custom_call.1} parent=39 // pred_fallthru
          _
        // Predicated region
        $region45: #{tpu_custom_call.1} parent=39 // pred_check
          %p239 = pneg %p65
        $region46: #{tpu_custom_call.1} parent=39 // pred_check_branch
          %241 = sbr.rel (%p239) target = $region48
        $region47: #{tpu_custom_call.1} parent=39 // pred_region
          %242 = dma.done [#allocation6], 640
        $region48: #{tpu_custom_call.1} parent=39 // pred_fallthru
          _
        // Predicated region
        $region49: #{tpu_custom_call.1} parent=39 // pred_check
          %p243 = pneg %p107
        $region50: #{tpu_custom_call.1} parent=39 // pred_check_branch
          %245 = sbr.rel (%p243) target = $region52
        $region51: #{tpu_custom_call.1} parent=39 // pred_region
          %246 = dma.done [#allocation6], 8192
        $region52: #{tpu_custom_call.1} parent=39 // pred_fallthru
          _
        %s247 = sand.u32 %s31, 1
        %s248 = scalar_lea.sflag [#allocation3], %s247
        %s249 = sand.u32 %s31, 1
        %s250 = smul.addr %s249, 8
        %s251 = scalar_lea.vmem [#allocation2], %s250
        %p252 = pneg %p44
        %p253 = pneg %p41
        %p254 = pneg %p65
        %p255 = pneg %p62
        %p256 = pneg %p86
        %p257 = pneg %p83
        %p258 = pneg %p107
        %p259 = pneg %p104
        %p260 = pneg %p128
        %p261 = pneg %p125
        %p262 = pneg %p154
        %p263 = pneg %p151
        %s264 = sand.u32 %s141, 1
        %s265 = scalar_lea.sflag [#allocation4], %s264
        %s266 = sand.u32 %s141, 1
        %s267 = smul.addr %s266, 32
        %s268 = scalar_lea.vmem [#allocation8], %s267
        %v269 = vld [vmem:[%s234] sm:$0xff]
        %v270 = vld [vmem:[#allocation5] sm:$0xff]
        %v271 = vld [vmem:[#allocation5 + $0x8] sm:$0xff]
        %v272 = vld [vmem:[#allocation5 + $0x10] sm:$0xff]
        %v273 = vld [vmem:[#allocation5 + $0x18] sm:$0xff]
        %v274 = vld [vmem:[#allocation5 + $0x20] sm:$0xff]
        %v275 = vld [vmem:[%s2] sm:$0x1]
        %v277 = vlaneseq
        %v278 = vshrl.u32 %v277, 7
        %v279 = vsub.s32 0, %v278
        %v280 = vrot.slane %v275, %v279
        %vm282 = vcmask 326656
        %v284 = vsel %vm282, %v269, 0
        %286 = vmatprep.subr.mxu0 0.0
        %287 = vmatpush1.msra.mxu0 0.0
        %288 = vmatprep.subr.mxu0 0.0
        %289 = vmatpush1.msra.mxu0 0.0
        %290 = vmatprep.subr.mxu0 0.0
        %291 = vmatpush1.msra.mxu0 0.0
        %292 = vmatprep.subr.mxu0 0.0
        %293 = vmatpush1.msra.mxu0 0.0
        %294 = vmatprep.subr.mxu0 0.0
        %295 = vmatpush1.msra.mxu0 0.0
        %296 = vmatprep.subr.mxu0 0.0
        %297 = vmatpush1.msra.mxu0 0.0
        %298 = vmatprep.subr.mxu0 0.0
        %299 = vmatpush1.msra.mxu0 0.0
        %300 = vmatprep.subr.mxu0 0.0
        %301 = vmatpush1.msra.mxu0 0.0
        %302 = vmatprep.subr.mxu0 0.0
        %303 = vmatpush1.msra.mxu0 0.0
        %304 = vmatprep.subr.mxu0 0.0
        %305 = vmatpush1.msra.mxu0 0.0
        %306 = vmatprep.subr.mxu0 0.0
        %307 = vmatpush1.msra.mxu0 0.0
        %308 = vmatprep.subr.mxu0 0.0
        %309 = vmatpush1.msra.mxu0 %v274
        %310 = vmatprep.subr.mxu0 0.0
        %311 = vmatpush1.msra.mxu0 %v273
        %312 = vmatprep.subr.mxu0 0.0
        %313 = vmatpush1.msra.mxu0 %v272
        %314 = vmatprep.subr.mxu0 0.0
        %315 = vmatpush1.msra.mxu0 %v271
        %316 = vmatprep.subr.mxu0 0.0
        %317 = vmatpush1.msra.mxu0 %v270
        %318 = vmatprep.subr.mxu0 0.0
        %319 = vmatpush2.msra.mxu0 0.0
        %320 = vmatprep.subr.mxu0 0.0
        %321 = vmatpush2.msra.mxu0 0.0
        %322 = vmatprep.subr.mxu0 0.0
        %323 = vmatpush2.msra.mxu0 0.0
        %324 = vmatprep.subr.mxu0 0.0
        %325 = vmatpush2.msra.mxu0 0.0
        %326 = vmatprep.subr.mxu0 0.0
        %327 = vmatpush2.msra.mxu0 0.0
        %328 = vmatprep.subr.mxu0 0.0
        %329 = vmatpush2.msra.mxu0 0.0
        %330 = vmatprep.subr.mxu0 0.0
        %331 = vmatpush2.msra.mxu0 0.0
        %332 = vmatprep.subr.mxu0 0.0
        %333 = vmatpush2.msra.mxu0 0.0
        %334 = vmatprep.subr.mxu0 0.0
        %335 = vmatpush2.msra.mxu0 0.0
        %336 = vmatprep.subr.mxu0 0.0
        %337 = vmatpush2.msra.mxu0 0.0
        %338 = vmatprep.subr.mxu0 0.0
        %339 = vmatpush2.msra.mxu0 0.0
        %340 = vmatprep.subr.mxu0 0.0
        %341 = vmatpush2.msra.mxu0 0.0
        %342 = vmatprep.subr.mxu0 0.0
        %343 = vmatpush2.msra.mxu0 0.0
        %344 = vmatprep.subr.mxu0 0.0
        %345 = vmatpush2.msra.mxu0 0.0
        %346 = vmatprep.subr.mxu0 0.0
        %347 = vmatpush2.msra.mxu0 0.0
        %348 = vmatprep.subr.mxu0 0.0
        %349 = vmatpush2.msra.mxu0 0.0
        %350 = vmatprep.mubr.f32.mxu0 0.0
        %351 = vmatmul.mubr.f32.gmra.mxu0 %v284
        %v352 = vpop.f32.mrf.mxu0
        %v353 = vadd.f32 %v280, %v352
        %v354 = vpop.f32.mrf.mxu0
        %355 = vdwg.mxu0
        %v356 = vmax.f32 %v353, 0.0
        %v357 = vld [vmem:[#allocation7] sm:$0xff]
        %v358 = vld [vmem:[#allocation7 + $0x8] sm:$0xff]
        %v359 = vld [vmem:[#allocation7 + $0x10] sm:$0xff]
        %v360 = vld [vmem:[#allocation7 + $0x18] sm:$0xff]
        %v361 = vld [vmem:[#allocation7 + $0x20] sm:$0xff]
        %v362 = vld [vmem:[#allocation7 + $0x28] sm:$0xff]
        %v363 = vld [vmem:[#allocation7 + $0x30] sm:$0xff]
        %v364 = vld [vmem:[#allocation7 + $0x38] sm:$0xff]
        %v365 = vld [vmem:[#allocation7 + $0x40] sm:$0xff]
        %v366 = vld [vmem:[#allocation7 + $0x48] sm:$0xff]
        %v367 = vld [vmem:[#allocation7 + $0x50] sm:$0xff]
        %v368 = vld [vmem:[#allocation7 + $0x58] sm:$0xff]
        %v369 = vld [vmem:[#allocation7 + $0x60] sm:$0xff]
        %v370 = vld [vmem:[#allocation7 + $0x68] sm:$0xff]
        %v371 = vld [vmem:[#allocation7 + $0x70] sm:$0xff]
        %v372 = vld [vmem:[#allocation7 + $0x78] sm:$0xff]
        %v373 = vld [vmem:[#allocation7 + $0x80] sm:$0xff]
        %v374 = vld [vmem:[#allocation7 + $0x88] sm:$0xff]
        %v375 = vld [vmem:[#allocation7 + $0x90] sm:$0xff]
        %v376 = vld [vmem:[#allocation7 + $0x98] sm:$0xff]
        %v377 = vld [vmem:[#allocation7 + $0xa0] sm:$0xff]
        %v378 = vld [vmem:[#allocation7 + $0xa8] sm:$0xff]
        %v379 = vld [vmem:[#allocation7 + $0xb0] sm:$0xff]
        %v380 = vld [vmem:[#allocation7 + $0xb8] sm:$0xff]
        %v381 = vld [vmem:[#allocation7 + $0xc0] sm:$0xff]
        %v382 = vld [vmem:[#allocation7 + $0xc8] sm:$0xff]
        %v383 = vld [vmem:[#allocation7 + $0xd0] sm:$0xff]
        %v384 = vld [vmem:[#allocation7 + $0xd8] sm:$0xff]
        %v385 = vld [vmem:[#allocation7 + $0xe0] sm:$0xff]
        %v386 = vld [vmem:[#allocation7 + $0xe8] sm:$0xff]
        %v387 = vld [vmem:[#allocation7 + $0xf0] sm:$0xff]
        %v388 = vld [vmem:[#allocation7 + $0xf8] sm:$0xff]
        %v389 = vld [vmem:[#allocation7 + $0x100] sm:$0xff]
        %v390 = vld [vmem:[#allocation7 + $0x108] sm:$0xff]
        %v391 = vld [vmem:[#allocation7 + $0x110] sm:$0xff]
        %v392 = vld [vmem:[#allocation7 + $0x118] sm:$0xff]
        %v393 = vld [vmem:[#allocation7 + $0x120] sm:$0xff]
        %v394 = vld [vmem:[#allocation7 + $0x128] sm:$0xff]
        %v395 = vld [vmem:[#allocation7 + $0x130] sm:$0xff]
        %v396 = vld [vmem:[#allocation7 + $0x138] sm:$0xff]
        %v397 = vld [vmem:[#allocation7 + $0x140] sm:$0xff]
        %v398 = vld [vmem:[#allocation7 + $0x148] sm:$0xff]
        %v399 = vld [vmem:[#allocation7 + $0x150] sm:$0xff]
        %v400 = vld [vmem:[#allocation7 + $0x158] sm:$0xff]
        %v401 = vld [vmem:[#allocation7 + $0x160] sm:$0xff]
        %v402 = vld [vmem:[#allocation7 + $0x168] sm:$0xff]
        %v403 = vld [vmem:[#allocation7 + $0x170] sm:$0xff]
        %v404 = vld [vmem:[#allocation7 + $0x178] sm:$0xff]
        %v405 = vld [vmem:[#allocation7 + $0x180] sm:$0xff]
        %v406 = vld [vmem:[#allocation7 + $0x188] sm:$0xff]
        %v407 = vld [vmem:[#allocation7 + $0x190] sm:$0xff]
        %v408 = vld [vmem:[#allocation7 + $0x198] sm:$0xff]
        %v409 = vld [vmem:[#allocation7 + $0x1a0] sm:$0xff]
        %v410 = vld [vmem:[#allocation7 + $0x1a8] sm:$0xff]
        %v411 = vld [vmem:[#allocation7 + $0x1b0] sm:$0xff]
        %v412 = vld [vmem:[#allocation7 + $0x1b8] sm:$0xff]
        %v413 = vld [vmem:[#allocation7 + $0x1c0] sm:$0xff]
        %v414 = vld [vmem:[#allocation7 + $0x1c8] sm:$0xff]
        %v415 = vld [vmem:[#allocation7 + $0x1d0] sm:$0xff]
        %v416 = vld [vmem:[#allocation7 + $0x1d8] sm:$0xff]
        %v417 = vld [vmem:[#allocation7 + $0x1e0] sm:$0xff]
        %v418 = vld [vmem:[#allocation7 + $0x1e8] sm:$0xff]
        %v419 = vld [vmem:[#allocation7 + $0x1f0] sm:$0xff]
        %v420 = vld [vmem:[#allocation7 + $0x1f8] sm:$0xff]
        %v421 = vld [vmem:[%s4] sm:$0xf]
        %v423 = vlaneseq
        %v424 = vshrl.u32 %v423, 7
        %v425 = vsub.s32 0, %v424
        %v426 = vrot.slane %v421, %v425
        %v427 = vlaneseq
        %v428 = vshrl.u32 %v427, 7
        %v429 = vsub.s32 1, %v428
        %v430 = vrot.slane %v421, %v429
        %v431 = vlaneseq
        %v432 = vshrl.u32 %v431, 7
        %v433 = vsub.s32 2, %v432
        %v434 = vrot.slane %v421, %v433
        %v435 = vlaneseq
        %v436 = vshrl.u32 %v435, 7
        %v437 = vsub.s32 3, %v436
        %v438 = vrot.slane %v421, %v437
        %443 = vmatprep.subr.mxu0 %v418
        %444 = vmatpush1.msra.mxu0 %v417
        %445 = vmatprep.subr.mxu0 %v414
        %446 = vmatpush1.msra.mxu0 %v413
        %447 = vmatprep.subr.mxu0 %v410
        %448 = vmatpush1.msra.mxu0 %v409
        %449 = vmatprep.subr.mxu0 %v406
        %450 = vmatpush1.msra.mxu0 %v405
        %451 = vmatprep.subr.mxu0 %v402
        %452 = vmatpush1.msra.mxu0 %v401
        %453 = vmatprep.subr.mxu0 %v398
        %454 = vmatpush1.msra.mxu0 %v397
        %455 = vmatprep.subr.mxu0 %v394
        %456 = vmatpush1.msra.mxu0 %v393
        %457 = vmatprep.subr.mxu0 %v390
        %458 = vmatpush1.msra.mxu0 %v389
        %459 = vmatprep.subr.mxu0 %v386
        %460 = vmatpush1.msra.mxu0 %v385
        %461 = vmatprep.subr.mxu0 %v382
        %462 = vmatpush1.msra.mxu0 %v381
        %463 = vmatprep.subr.mxu0 %v378
        %464 = vmatpush1.msra.mxu0 %v377
        %465 = vmatprep.subr.mxu0 %v374
        %466 = vmatpush1.msra.mxu0 %v373
        %467 = vmatprep.subr.mxu0 %v370
        %468 = vmatpush1.msra.mxu0 %v369
        %469 = vmatprep.subr.mxu0 %v366
        %470 = vmatpush1.msra.mxu0 %v365
        %471 = vmatprep.subr.mxu0 %v362
        %472 = vmatpush1.msra.mxu0 %v361
        %473 = vmatprep.subr.mxu0 %v358
        %474 = vmatpush1.msra.mxu0 %v357
        %475 = vmatprep.subr.mxu0 0.0
        %476 = vmatpush2.msra.mxu0 0.0
        %477 = vmatprep.subr.mxu0 0.0
        %478 = vmatpush2.msra.mxu0 0.0
        %479 = vmatprep.subr.mxu0 0.0
        %480 = vmatpush2.msra.mxu0 0.0
        %481 = vmatprep.subr.mxu0 0.0
        %482 = vmatpush2.msra.mxu0 0.0
        %483 = vmatprep.subr.mxu0 0.0
        %484 = vmatpush2.msra.mxu0 0.0
        %485 = vmatprep.subr.mxu0 0.0
        %486 = vmatpush2.msra.mxu0 0.0
        %487 = vmatprep.subr.mxu0 0.0
        %488 = vmatpush2.msra.mxu0 0.0
        %489 = vmatprep.subr.mxu0 0.0
        %490 = vmatpush2.msra.mxu0 0.0
        %491 = vmatprep.subr.mxu0 0.0
        %492 = vmatpush2.msra.mxu0 0.0
        %493 = vmatprep.subr.mxu0 0.0
        %494 = vmatpush2.msra.mxu0 0.0
        %495 = vmatprep.subr.mxu0 0.0
        %496 = vmatpush2.msra.mxu0 0.0
        %497 = vmatprep.subr.mxu0 0.0
        %498 = vmatpush2.msra.mxu0 0.0
        %499 = vmatprep.subr.mxu0 0.0
        %500 = vmatpush2.msra.mxu0 0.0
        %501 = vmatprep.subr.mxu0 0.0
        %502 = vmatpush2.msra.mxu0 0.0
        %503 = vmatprep.subr.mxu0 0.0
        %504 = vmatpush2.msra.mxu0 0.0
        %505 = vmatprep.subr.mxu0 0.0
        %506 = vmatpush2.msra.mxu0 0.0
        %507 = vmatprep.mubr.f32.mxu0 0.0
        %508 = vmatmul.mubr.f32.gmra.mxu0 %v356
        %v509 = vpop.f32.mrf.mxu0
        %v510 = vadd.f32 %v426, %v509
        %v511 = vpop.f32.mrf.mxu0
        %v512 = vadd.f32 %v430, %v511
        %513 = vdwg.mxu0
        %514 = vmatprep.subr.mxu0 %v420
        %515 = vmatpush1.msra.mxu0 %v419
        %516 = vmatprep.subr.mxu0 %v416
        %517 = vmatpush1.msra.mxu0 %v415
        %518 = vmatprep.subr.mxu0 %v412
        %519 = vmatpush1.msra.mxu0 %v411
        %520 = vmatprep.subr.mxu0 %v408
        %521 = vmatpush1.msra.mxu0 %v407
        %522 = vmatprep.subr.mxu0 %v404
        %523 = vmatpush1.msra.mxu0 %v403
        %524 = vmatprep.subr.mxu0 %v400
        %525 = vmatpush1.msra.mxu0 %v399
        %526 = vmatprep.subr.mxu0 %v396
        %527 = vmatpush1.msra.mxu0 %v395
        %528 = vmatprep.subr.mxu0 %v392
        %529 = vmatpush1.msra.mxu0 %v391
        %530 = vmatprep.subr.mxu0 %v388
        %531 = vmatpush1.msra.mxu0 %v387
        %532 = vmatprep.subr.mxu0 %v384
        %533 = vmatpush1.msra.mxu0 %v383
        %534 = vmatprep.subr.mxu0 %v380
        %535 = vmatpush1.msra.mxu0 %v379
        %536 = vmatprep.subr.mxu0 %v376
        %537 = vmatpush1.msra.mxu0 %v375
        %538 = vmatprep.subr.mxu0 %v372
        %539 = vmatpush1.msra.mxu0 %v371
        %540 = vmatprep.subr.mxu0 %v368
        %541 = vmatpush1.msra.mxu0 %v367
        %542 = vmatprep.subr.mxu0 %v364
        %543 = vmatpush1.msra.mxu0 %v363
        %544 = vmatprep.subr.mxu0 %v360
        %545 = vmatpush1.msra.mxu0 %v359
        %546 = vmatprep.subr.mxu0 0.0
        %547 = vmatpush2.msra.mxu0 0.0
        %548 = vmatprep.subr.mxu0 0.0
        %549 = vmatpush2.msra.mxu0 0.0
        %550 = vmatprep.subr.mxu0 0.0
        %551 = vmatpush2.msra.mxu0 0.0
        %552 = vmatprep.subr.mxu0 0.0
        %553 = vmatpush2.msra.mxu0 0.0
        %554 = vmatprep.subr.mxu0 0.0
        %555 = vmatpush2.msra.mxu0 0.0
        %556 = vmatprep.subr.mxu0 0.0
        %557 = vmatpush2.msra.mxu0 0.0
        %558 = vmatprep.subr.mxu0 0.0
        %559 = vmatpush2.msra.mxu0 0.0
        %560 = vmatprep.subr.mxu0 0.0
        %561 = vmatpush2.msra.mxu0 0.0
        %562 = vmatprep.subr.mxu0 0.0
        %563 = vmatpush2.msra.mxu0 0.0
        %564 = vmatprep.subr.mxu0 0.0
        %565 = vmatpush2.msra.mxu0 0.0
        %566 = vmatprep.subr.mxu0 0.0
        %567 = vmatpush2.msra.mxu0 0.0
        %568 = vmatprep.subr.mxu0 0.0
        %569 = vmatpush2.msra.mxu0 0.0
        %570 = vmatprep.subr.mxu0 0.0
        %571 = vmatpush2.msra.mxu0 0.0
        %572 = vmatprep.subr.mxu0 0.0
        %573 = vmatpush2.msra.mxu0 0.0
        %574 = vmatprep.subr.mxu0 0.0
        %575 = vmatpush2.msra.mxu0 0.0
        %576 = vmatprep.subr.mxu0 0.0
        %577 = vmatpush2.msra.mxu0 0.0
        %578 = vmatprep.mubr.f32.mxu0 0.0
        %579 = vmatmul.mubr.f32.gmra.mxu0 %v356
        %v580 = vpop.f32.mrf.mxu0
        %v581 = vadd.f32 %v434, %v580
        %v582 = vpop.f32.mrf.mxu0
        %v583 = vadd.f32 %v438, %v582
        %584 = vdwg.mxu0
        %v585 = vmax.f32 %v510, 0.0
        %v586 = vmax.f32 %v512, 0.0
        %v587 = vmax.f32 %v581, 0.0
        %v588 = vmax.f32 %v583, 0.0
        %589 = vst [vmem:[%s268] sm:$0xff] %v585
        %590 = vst [vmem:[%s268 + $0x8] sm:$0xff] %v586
        %591 = vst [vmem:[%s268 + $0x10] sm:$0xff] %v587
        %592 = vst [vmem:[%s268 + $0x18] sm:$0xff] %v588
        %s593 = sand.u32 %s141, 1
        %s594 = scalar_lea.sflag [#allocation4], %s593
        %s595 = sand.u32 %s141, 1
        %s596 = smul.addr %s595, 32
        %s597 = scalar_lea.vmem [#allocation8], %s596
        // Predicated region
        $region53: #{tpu_custom_call.1} parent=39 // pred_check
          %p598 = pneg %p151
        $region54: #{tpu_custom_call.1} parent=39 // pred_check_branch
          %600 = sbr.rel (%p598) target = $region56
        $region55: #{tpu_custom_call.1} parent=39 // pred_region
          %s602 = ssub.s32 512, 512
          %603 = vsyncadd %s594, %s602
          %s604 = smul.addr %s23, 4
          %s605 = smul.addr %s604, 128
          %s606 = scalar_lea.hbm %s5, %s605
          %s608 = sshll.u32 %s597, 4
          %s609 = int_to_ptr.vmem [resolvable:$true] %s608
          %611 = dma.vmem_to_hbm [thread:$0]  %s609, 512, %s606, %s594
        $region56: #{tpu_custom_call.1} parent=39 // pred_fallthru
          _
      $region40: #{tpu_custom_call.1} parent=5 // pred_fallthru
        _
      %p612 = scmp.le.s32.totalorder 2, %s18
      // Predicated region
      $region57: #{tpu_custom_call.1} parent=5 // pred_check
        %p613 = pneg %p612
      $region58: #{tpu_custom_call.1} parent=5 // pred_check_branch
        %615 = sbr.rel (%p613) target = $region60
      $region59: #{tpu_custom_call.1} parent=5 // pred_region
        %s616 = ssub.s32 %s18, 2
        // Predicated region
        $region61: #{tpu_custom_call.1} parent=59 // pred_check
          %p617 = pneg %p157
        $region62: #{tpu_custom_call.1} parent=59 // pred_check_branch
          %619 = sbr.rel (%p617) target = $region64
        $region63: #{tpu_custom_call.1} parent=59 // pred_region
          %s620 = sand.u32 %s142, 1
          %s621 = scalar_lea.sflag [#allocation4], %s620
          %s622 = sand.u32 %s142, 1
          %s623 = smul.addr %s622, 32
          %s624 = scalar_lea.vmem [#allocation8], %s623
          %625 = dma.done %s621, 512
        $region64: #{tpu_custom_call.1} parent=59 // pred_fallthru
          _
      $region60: #{tpu_custom_call.1} parent=5 // pred_fallthru
        _
    $region6: #{tpu_custom_call.1} parent=1 // loop_footer
      %s22 = sadd.s32 1, %s18
    $region7: #{tpu_custom_call.1} parent=1 // loop_footer_branch
      %17 = sbr.rel target = $region3
    $region8: #{tpu_custom_call.1} parent=1 // loop_exit
      _
    %626 = vsyncpa [#allocation3], 1
    %s627 = scalar_lea.sflag [#allocation3], 1
    %628 = vsyncpa %s627, 1
    %629 = vsyncpa [#allocation6], 1
    %630 = vsyncpa [#allocation4], 1
    %s631 = scalar_lea.sflag [#allocation4], 1
    %632 = vsyncpa %s631, 1

</llo_original>
